<compile_context>
chip_gen: v7x
topology: tpu7x:2x2x1
jax: 0.10.0
libtpu: 0.0.40
codegen_flags: <defaults>
</compile_context>

<pallas_src>
import functools

import jax
import jax.numpy as jnp
from jax.experimental import pallas as pl
from jax.experimental.pallas import tpu as pltpu


def _round_up(x, m):
    return (x + m - 1) // m * m


def _decoder_decode_kernel(tok_ref, emb_ref, h0_ref, wall_ref, ball_ref,
                           wout_ref, bout_ref, logp_ref, hfin_ref, h_scr, *, hp):
    # tok_ref (scalar prefetch) is consumed by the BlockSpec index_maps
    # (embedding row gather); it is not needed in the body.
    del tok_ref
    t = pl.program_id(0)

    # Initialize the carried hidden state from the (VMEM-resident) h0 input.
    @pl.when(t == 0)
    def _():
        h_scr[...] = h0_ref[...]

    h = h_scr[...]                                          # (1, Hp) f32
    # embedding(input) -> relu  (f32 elementwise; v5e-friendly)
    x = jnp.maximum(emb_ref[0].astype(jnp.float32), 0.0)    # (1, Hp)

    # Single fused gate matmul: [x, h] @ [[Wi_r Wi_z Wi_n 0], [Wh_r Wh_z 0 Wh_n]]
    xh = jnp.concatenate([x, h], axis=-1).astype(jnp.bfloat16)        # (1, 2*Hp)
    g = jnp.dot(xh, wall_ref[...],
                preferred_element_type=jnp.float32) + ball_ref[...]   # (1, 4*Hp)

    a_r = g[:, 0 * hp:1 * hp]      # gi_r + gh_r (+ fused biases)
    a_z = g[:, 1 * hp:2 * hp]      # gi_z + gh_z
    gi_n = g[:, 2 * hp:3 * hp]
    gh_n = g[:, 3 * hp:4 * hp]

    r = jax.nn.sigmoid(a_r)
    z = jax.nn.sigmoid(a_z)
    n = jnp.tanh(gi_n + r * gh_n)
    h_new = (1.0 - z) * n + z * h                           # (1, Hp) f32

    h_scr[...] = h_new
    hfin_ref[...] = h_new

    # out = Linear(H, V) ; log_softmax.  Padded vocab lanes carry bias = -1e9 so
    # they contribute exp(...)=0 to the logsumexp.
    logits = jnp.dot(h_new.astype(jnp.bfloat16), wout_ref[...],
                     preferred_element_type=jnp.float32) + bout_ref[...]  # (1, Vp)
    m = jnp.max(logits, axis=-1, keepdims=True)
    s = logits - m
    lse = jnp.log(jnp.sum(jnp.exp(s), axis=-1, keepdims=True))
    logp_ref[0] = s - lse


def decoder_forward(token_ids, hidden, params):
    """Runs T chained DecoderRNN.forward steps inside one pallas_call.

    token_ids : (T,) int32 decoder input tokens (T=1 == the PyTorch forward)
    hidden    : (1, 1, H) float32
    returns   : (log_probs (T, V), final hidden (1, 1, H))
    """
    H, V = params["hidden_size"], params["output_size"]
    Hp, Vp = params["Hp"], params["Vp"]

    token_ids = jnp.asarray(token_ids, jnp.int32).reshape(-1)
    T = token_ids.shape[0]

    h0 = jnp.zeros((1, Hp), jnp.float32).at[:, :H].set(
        hidden.reshape(1, H).astype(jnp.float32))

    kernel = functools.partial(_decoder_decode_kernel, hp=Hp)

    grid_spec = pltpu.PrefetchScalarGridSpec(
        num_scalar_prefetch=1,          # token ids -> SMEM, drive the emb gather
        grid=(T,),
        in_specs=[
            # embedding row gather: block index = token id of this step
            pl.BlockSpec((1, 1, Hp), lambda t, tok: (tok[t], 0, 0)),
            # everything below: constant index map -> fetched once, VMEM-resident
            pl.BlockSpec((1, Hp), lambda t, tok: (0, 0)),            # h0
            pl.BlockSpec((2 * Hp, 4 * Hp), lambda t, tok: (0, 0)),   # fused gate W
            pl.BlockSpec((1, 4 * Hp), lambda t, tok: (0, 0)),        # fused gate b
            pl.BlockSpec((Hp, Vp), lambda t, tok: (0, 0)),           # out W
            pl.BlockSpec((1, Vp), lambda t, tok: (0, 0)),            # out b
        ],
        out_specs=[
            pl.BlockSpec((1, 1, Vp), lambda t, tok: (t, 0, 0)),      # per-step logp
            pl.BlockSpec((1, Hp), lambda t, tok: (0, 0)),            # final hidden
        ],
        scratch_shapes=[pltpu.VMEM((1, Hp), jnp.float32)],           # hidden carry
    )

    logp_pad, h_fin = pl.pallas_call(
        kernel,
        grid_spec=grid_spec,
        out_shape=(
            jax.ShapeDtypeStruct((T, 1, Vp), jnp.float32),
            jax.ShapeDtypeStruct((1, Hp), jnp.float32),
        ),
        compiler_params=pltpu.CompilerParams(
            # sequential hidden-state carry across steps -> "arbitrary"
            dimension_semantics=("arbitrary",),
        ),
    )(token_ids, params["emb_pad"], h0, params["w_all"], params["b_all"],
      params["w_out_pad"], params["b_out_pad"])

    return logp_pad[:, 0, :V], h_fin[:, :H].reshape(1, 1, H)


def make_params(key, hidden_size, output_size):
    """PyTorch-style raw parameters + fused/padded kernel-layout operands."""
    H, V = hidden_size, output_size
    Hp = _round_up(H, 128)
    Vp = _round_up(V, 128)

    ks = jax.random.split(key, 8)
    bound = 1.0 / jnp.sqrt(jnp.float32(H))

    def unif(k, shape):
        return jax.random.uniform(k, shape, jnp.float32, -bound, bound)

    embedding = jax.random.normal(ks[0], (V, H), jnp.float32)   # nn.Embedding N(0,1)
    w_ih = unif(ks[1], (3 * H, H))                              # GRU weight_ih (r,z,n)
    w_hh = unif(ks[2], (3 * H, H))
    b_ih = unif(ks[3], (3 * H,))
    b_hh = unif(ks[4], (3 * H,))
    w_out = unif(ks[5], (V, H))                                 # nn.Linear weight
    b_out = unif(ks[6], (V,))

    def gw(w, i):
        return w[i * H:(i + 1) * H, :]

    def gb(b, i):
        return b[i * H:(i + 1) * H]

    # ---- kernel layout (padded, fused, bf16 MXU operands) ----
    emb_pad = jnp.zeros((V, 1, Hp), jnp.float32).at[:, 0, :H].set(embedding)
    emb_pad = emb_pad.astype(jnp.bfloat16)

    # Fused gate weight: rows 0:Hp are the x contribution, rows Hp:2Hp the h
    # contribution; column blocks are [r | z | n_input | n_hidden], each Hp wide.
    w_all = jnp.zeros((2 * Hp, 4 * Hp), jnp.float32)
    w_all = w_all.at[0:H, 0 * Hp:0 * Hp + H].set(gw(w_ih, 0).T)      # W_ir
    w_all = w_all.at[0:H, 1 * Hp:1 * Hp + H].set(gw(w_ih, 1).T)      # W_iz
    w_all = w_all.at[0:H, 2 * Hp:2 * Hp + H].set(gw(w_ih, 2).T)      # W_in
    w_all = w_all.at[Hp:Hp + H, 0 * Hp:0 * Hp + H].set(gw(w_hh, 0).T)  # W_hr
    w_all = w_all.at[Hp:Hp + H, 1 * Hp:1 * Hp + H].set(gw(w_hh, 1).T)  # W_hz
    w_all = w_all.at[Hp:Hp + H, 3 * Hp:3 * Hp + H].set(gw(w_hh, 2).T)  # W_hn
    w_all = w_all.astype(jnp.bfloat16)

    b_all = jnp.zeros((1, 4 * Hp), jnp.float32)
    b_all = b_all.at[0, 0 * Hp:0 * Hp + H].set(gb(b_ih, 0) + gb(b_hh, 0))
    b_all = b_all.at[0, 1 * Hp:1 * Hp + H].set(gb(b_ih, 1) + gb(b_hh, 1))
    b_all = b_all.at[0, 2 * Hp:2 * Hp + H].set(gb(b_ih, 2))
    b_all = b_all.at[0, 3 * Hp:3 * Hp + H].set(gb(b_hh, 2))

    w_out_pad = jnp.zeros((Hp, Vp), jnp.float32).at[:H, :V].set(w_out.T)
    w_out_pad = w_out_pad.astype(jnp.bfloat16)
    b_out_pad = jnp.full((1, Vp), -1e9, jnp.float32).at[0, :V].set(b_out)

    return {
        "hidden_size": H, "output_size": V, "Hp": Hp, "Vp": Vp,
        # raw (PyTorch-semantics, f32) params for the reference
        "embedding": embedding, "w_ih": w_ih, "w_hh": w_hh,
        "b_ih": b_ih, "b_hh": b_hh, "w_out": w_out, "b_out": b_out,
        # fused / padded kernel operands
        "emb_pad": emb_pad, "w_all": w_all, "b_all": b_all,
        "w_out_pad": w_out_pad, "b_out_pad": b_out_pad,
    }


def reference_forward_step(token_id, hidden, params):
    """Pure-JAX f32 reference of one DecoderRNN.forward (PyTorch semantics)."""
    H = params["hidden_size"]
    x = jnp.maximum(params["embedding"][token_id].reshape(1, H), 0.0)
    h = hidden.reshape(1, H)
    gi = x @ params["w_ih"].T + params["b_ih"]
    gh = h @ params["w_hh"].T + params["b_hh"]
    gi_r, gi_z, gi_n = gi[:, :H], gi[:, H:2 * H], gi[:, 2 * H:]
    gh_r, gh_z, gh_n = gh[:, :H], gh[:, H:2 * H], gh[:, 2 * H:]
    r = jax.nn.sigmoid(gi_r + gh_r)
    z = jax.nn.sigmoid(gi_z + gh_z)
    n = jnp.tanh(gi_n + r * gh_n)
    h_new = (1.0 - z) * n + z * h
    logits = h_new @ params["w_out"].T + params["b_out"]
    logp = jax.nn.log_softmax(logits, axis=1)
    return logp, h_new.reshape(1, 1, H)


if __name__ == "__main__":
    HIDDEN = 32
    OUTPUT = 64
    T = 8  # decode steps amortized inside one kernel launch

    key = jax.random.PRNGKey(0)
    pkey, tkey = jax.random.split(key)
    params = make_params(pkey, HIDDEN, OUTPUT)

    token_ids = jax.random.randint(tkey, (T,), 0, OUTPUT, dtype=jnp.int32)
    hidden0 = jnp.zeros((1, 1, HIDDEN), jnp.float32)   # initHidden()

    logp, h_fin = decoder_forward(token_ids, hidden0, params)
    jax.block_until_ready((logp, h_fin))

    # reference: chain T single-step forwards (each step == PyTorch forward)
    h = hidden0
    ref_logps = []
    for t in range(T):
        lp, h = reference_forward_step(token_ids[t], h, params)
        ref_logps.append(lp)
    ref_logp = jnp.concatenate(ref_logps, axis=0)

    assert logp.shape == (T, OUTPUT) and h_fin.shape == (1, 1, HIDDEN)
    # bf16 MXU inputs (f32 accumulation) vs the pure-f32 reference
    assert jnp.allclose(logp, ref_logp, atol=5e-2, rtol=5e-2), \
        float(jnp.max(jnp.abs(logp - ref_logp)))
    assert jnp.allclose(h_fin, h, atol=5e-2, rtol=5e-2), \
        float(jnp.max(jnp.abs(h_fin - h)))

    print("KERNEL_OK")
</pallas_src>

<mosaic_0001>
module attributes {stable_mosaic.version = 11 : i64} {
  func.func @_decoder_decode_kernel(%arg0: i32, %arg1: memref<8xi32, #tpu.memory_space<smem>>, %arg2: memref<1x1x128xbf16, #tpu.memory_space<vmem>>, %arg3: memref<1x128xf32, #tpu.memory_space<vmem>>, %arg4: memref<256x512xbf16, #tpu.memory_space<vmem>>, %arg5: memref<1x512xf32, #tpu.memory_space<vmem>>, %arg6: memref<128x128xbf16, #tpu.memory_space<vmem>>, %arg7: memref<1x128xf32, #tpu.memory_space<vmem>>, %arg8: memref<1x1x128xf32, #tpu.memory_space<vmem>>, %arg9: memref<1x128xf32, #tpu.memory_space<vmem>>, %arg10: memref<1x128xf32, #tpu.memory_space<vmem>>) attributes {dimension_semantics = [#tpu.dimension_semantics<arbitrary>], iteration_bounds = array<i64: 8>, scalar_prefetch = 1 : i64, scratch_operands = 1 : i64, tpu.core_type = #tpu.core_type<tc>, window_params = [{transform_indices = @transform_0, window_bounds = array<i64: 1, 1, 128>}, {pipeline_mode = #tpu.pipeline_mode<synchronous>, transform_indices = @transform_1, window_bounds = array<i64: 1, 128>}, {pipeline_mode = #tpu.pipeline_mode<synchronous>, transform_indices = @transform_2, window_bounds = array<i64: 256, 512>}, {pipeline_mode = #tpu.pipeline_mode<synchronous>, transform_indices = @transform_3, window_bounds = array<i64: 1, 512>}, {pipeline_mode = #tpu.pipeline_mode<synchronous>, transform_indices = @transform_4, window_bounds = array<i64: 128, 128>}, {pipeline_mode = #tpu.pipeline_mode<synchronous>, transform_indices = @transform_5, window_bounds = array<i64: 1, 128>}, {transform_indices = @transform_6, window_bounds = array<i64: 1, 1, 128>}, {pipeline_mode = #tpu.pipeline_mode<synchronous>, transform_indices = @transform_7, window_bounds = array<i64: 1, 128>}]} {
    %c0_i32 = arith.constant 0 : i32
    %0 = arith.cmpi eq, %arg0, %c0_i32 : i32
    %1 = arith.extui %0 : i1 to i32
    %c0_i32_0 = arith.constant 0 : i32
    %2 = arith.cmpi ne, %1, %c0_i32_0 : i32
    scf.if %2 {
      %c0_27 = arith.constant 0 : index
      %c0_28 = arith.constant 0 : index
      %57 = vector.load %arg3[%c0_27, %c0_28] : memref<1x128xf32, #tpu.memory_space<vmem>>, vector<1x128xf32>
      %c0_29 = arith.constant 0 : index
      %c0_30 = arith.constant 0 : index
      %58 = vector.load %arg10[%c0_29, %c0_30] : memref<1x128xf32, #tpu.memory_space<vmem>>, vector<1x128xf32>
      tpu.vector_store %arg10[%c0_29, %c0_30], %57 {strides = array<i32>} : memref<1x128xf32, #tpu.memory_space<vmem>>, vector<1x128xf32>,
    } else {
    }
    %c0 = arith.constant 0 : index
    %c0_1 = arith.constant 0 : index
    %3 = vector.load %arg10[%c0, %c0_1] : memref<1x128xf32, #tpu.memory_space<vmem>>, vector<1x128xf32>
    %c0_2 = arith.constant 0 : index
    %c0_3 = arith.constant 0 : index
    %c0_4 = arith.constant 0 : index
    %4 = vector.load %arg2[%c0_2, %c0_3, %c0_4] : memref<1x1x128xbf16, #tpu.memory_space<vmem>>, vector<1x1x128xbf16>
    %5 = vector.shape_cast %4 : vector<1x1x128xbf16> to vector<1x128xbf16>
    %6 = arith.extf %5 : vector<1x128xbf16> to vector<1x128xf32>
    %cst = arith.constant 0.000000e+00 : f32
    %7 = vector.broadcast %cst : f32 to vector<1x128xf32>
    %8 = arith.maximumf %6, %7 : vector<1x128xf32>
    %9 = tpu.concatenate %8, %3 in 1 : vector<1x128xf32>, vector<1x128xf32> -> vector<1x256xf32>
    %10 = arith.truncf %9 : vector<1x256xf32> to vector<1x256xbf16>
    %c0_5 = arith.constant 0 : index
    %c0_6 = arith.constant 0 : index
    %11 = vector.load %arg4[%c0_5, %c0_6] : memref<256x512xbf16, #tpu.memory_space<vmem>>, vector<256x512xbf16>
    %cst_7 = arith.constant dense<0.000000e+00> : vector<1x512xf32>
    %12 = tpu.matmul %10, %11, %cst_7 {dimension_numbers = #tpu.dot_dimension_numbers<[1], [0], [0], [1], [0, 0, 1, 1], [], []>} : vector<1x256xbf16>, vector<256x512xbf16>, vector<1x512xf32> -> vector<1x512xf32>
    %c0_8 = arith.constant 0 : index
    %c0_9 = arith.constant 0 : index
    %13 = vector.load %arg5[%c0_8, %c0_9] : memref<1x512xf32, #tpu.memory_space<vmem>>, vector<1x512xf32>
    %14 = arith.addf %12, %13 : vector<1x512xf32>
    %15 = vector.extract_strided_slice %14 {offsets = [0, 0], sizes = [1, 128], strides = [1, 1]} : vector<1x512xf32> to vector<1x128xf32>
    %16 = vector.extract_strided_slice %14 {offsets = [0, 128], sizes = [1, 128], strides = [1, 1]} : vector<1x512xf32> to vector<1x128xf32>
    %17 = vector.extract_strided_slice %14 {offsets = [0, 256], sizes = [1, 128], strides = [1, 1]} : vector<1x512xf32> to vector<1x128xf32>
    %18 = vector.extract_strided_slice %14 {offsets = [0, 384], sizes = [1, 128], strides = [1, 1]} : vector<1x512xf32> to vector<1x128xf32>
    %19 = arith.negf %15 : vector<1x128xf32>
    %20 = math.exp %19 : vector<1x128xf32>
    %cst_10 = arith.constant 1.000000e+00 : f32
    %21 = vector.broadcast %cst_10 : f32 to vector<1x128xf32>
    %22 = arith.addf %21, %20 : vector<1x128xf32>
    %23 = arith.divf %21, %22 : vector<1x128xf32>
    %24 = arith.negf %16 : vector<1x128xf32>
    %25 = math.exp %24 : vector<1x128xf32>
    %cst_11 = arith.constant 1.000000e+00 : f32
    %26 = vector.broadcast %cst_11 : f32 to vector<1x128xf32>
    %27 = arith.addf %26, %25 : vector<1x128xf32>
    %28 = arith.divf %26, %27 : vector<1x128xf32>
    %29 = arith.mulf %23, %18 : vector<1x128xf32>
    %30 = arith.addf %17, %29 : vector<1x128xf32>
    %31 = math.tanh %30 : vector<1x128xf32>
    %cst_12 = arith.constant 1.000000e+00 : f32
    %32 = vector.broadcast %cst_12 : f32 to vector<1x128xf32>
    %33 = arith.subf %32, %28 : vector<1x128xf32>
    %34 = arith.mulf %33, %31 : vector<1x128xf32>
    %35 = arith.mulf %28, %3 : vector<1x128xf32>
    %36 = arith.addf %34, %35 : vector<1x128xf32>
    %c0_13 = arith.constant 0 : index
    %c0_14 = arith.constant 0 : index
    %37 = vector.load %arg10[%c0_13, %c0_14] : memref<1x128xf32, #tpu.memory_space<vmem>>, vector<1x128xf32>
    tpu.vector_store %arg10[%c0_13, %c0_14], %36 {strides = array<i32>} : memref<1x128xf32, #tpu.memory_space<vmem>>, vector<1x128xf32>,
    %c0_15 = arith.constant 0 : index
    %c0_16 = arith.constant 0 : index
    %38 = vector.load %arg9[%c0_15, %c0_16] : memref<1x128xf32, #tpu.memory_space<vmem>>, vector<1x128xf32>
    tpu.vector_store %arg9[%c0_15, %c0_16], %36 {strides = array<i32>} : memref<1x128xf32, #tpu.memory_space<vmem>>, vector<1x128xf32>,
    %39 = arith.truncf %36 : vector<1x128xf32> to vector<1x128xbf16>
    %c0_17 = arith.constant 0 : index
    %c0_18 = arith.constant 0 : index
    %40 = vector.load %arg6[%c0_17, %c0_18] : memref<128x128xbf16, #tpu.memory_space<vmem>>, vector<128x128xbf16>
    %cst_19 = arith.constant dense<0.000000e+00> : vector<1x128xf32>
    %41 = tpu.matmul %39, %40, %cst_19 {dimension_numbers = #tpu.dot_dimension_numbers<[1], [0], [0], [1], [0, 0, 1, 1], [], []>} : vector<1x128xbf16>, vector<128x128xbf16>, vector<1x128xf32> -> vector<1x128xf32>
    %c0_20 = arith.constant 0 : index
    %c0_21 = arith.constant 0 : index
    %42 = vector.load %arg7[%c0_20, %c0_21] : memref<1x128xf32, #tpu.memory_space<vmem>>, vector<1x128xf32>
    %43 = arith.addf %41, %42 : vector<1x128xf32>
    %cst_22 = arith.constant dense<0xFF800000> : vector<1xf32>
    %44 = vector.multi_reduction <maximumf>, %43, %cst_22 [1] : vector<1x128xf32> to vector<1xf32>
    %45 = vector.shape_cast %44 : vector<1xf32> to vector<1x1xf32>
    %46 = vector.broadcast %45 : vector<1x1xf32> to vector<1x128xf32>
    %47 = arith.subf %43, %46 : vector<1x128xf32>
    %48 = math.exp %47 : vector<1x128xf32>
    %cst_23 = arith.constant dense<0.000000e+00> : vector<1xf32>
    %49 = vector.multi_reduction <add>, %48, %cst_23 [1] : vector<1x128xf32> to vector<1xf32>
    %50 = vector.shape_cast %49 : vector<1xf32> to vector<1x1xf32>
    %51 = math.log %50 : vector<1x1xf32>
    %52 = vector.broadcast %51 : vector<1x1xf32> to vector<1x128xf32>
    %53 = arith.subf %47, %52 : vector<1x128xf32>
    %c0_24 = arith.constant 0 : index
    %c0_25 = arith.constant 0 : index
    %c0_26 = arith.constant 0 : index
    %54 = vector.load %arg8[%c0_24, %c0_25, %c0_26] : memref<1x1x128xf32, #tpu.memory_space<vmem>>, vector<1x1x128xf32>
    %55 = vector.shape_cast %54 : vector<1x1x128xf32> to vector<1x128xf32>
    %56 = vector.shape_cast %53 : vector<1x128xf32> to vector<1x1x128xf32>
    tpu.vector_store %arg8[%c0_24, %c0_25, %c0_26], %56 {strides = array<i32>} : memref<1x1x128xf32, #tpu.memory_space<vmem>>, vector<1x1x128xf32>,
    return
  }
  func.func @transform_0(%arg0: i32, %arg1: memref<8xi32, #tpu.memory_space<smem>>) -> (i32, i32, i32) {
    %0 = arith.index_cast %arg0 : i32 to index
    %1 = memref.load %arg1[%0] : memref<8xi32, #tpu.memory_space<smem>>
    %c0_i32 = arith.constant 0 : i32
    %c0_i32_0 = arith.constant 0 : i32
    %c0_i32_1 = arith.constant 0 : i32
    return %1, %c0_i32, %c0_i32_0 : i32, i32, i32
  }
  func.func @transform_1(%arg0: i32, %arg1: memref<8xi32, #tpu.memory_space<smem>>) -> (i32, i32) {
    %c0_i32 = arith.constant 0 : i32
    %c0_i32_0 = arith.constant 0 : i32
    %c0_i32_1 = arith.constant 0 : i32
    return %c0_i32, %c0_i32_0 : i32, i32
  }
  func.func @transform_2(%arg0: i32, %arg1: memref<8xi32, #tpu.memory_space<smem>>) -> (i32, i32) {
    %c0_i32 = arith.constant 0 : i32
    %c0_i32_0 = arith.constant 0 : i32
    %c0_i32_1 = arith.constant 0 : i32
    return %c0_i32, %c0_i32_0 : i32, i32
  }
  func.func @transform_3(%arg0: i32, %arg1: memref<8xi32, #tpu.memory_space<smem>>) -> (i32, i32) {
    %c0_i32 = arith.constant 0 : i32
    %c0_i32_0 = arith.constant 0 : i32
    %c0_i32_1 = arith.constant 0 : i32
    return %c0_i32, %c0_i32_0 : i32, i32
  }
  func.func @transform_4(%arg0: i32, %arg1: memref<8xi32, #tpu.memory_space<smem>>) -> (i32, i32) {
    %c0_i32 = arith.constant 0 : i32
    %c0_i32_0 = arith.constant 0 : i32
    %c0_i32_1 = arith.constant 0 : i32
    return %c0_i32, %c0_i32_0 : i32, i32
  }
  func.func @transform_5(%arg0: i32, %arg1: memref<8xi32, #tpu.memory_space<smem>>) -> (i32, i32) {
    %c0_i32 = arith.constant 0 : i32
    %c0_i32_0 = arith.constant 0 : i32
    %c0_i32_1 = arith.constant 0 : i32
    return %c0_i32, %c0_i32_0 : i32, i32
  }
  func.func @transform_6(%arg0: i32, %arg1: memref<8xi32, #tpu.memory_space<smem>>) -> (i32, i32, i32) {
    %c0_i32 = arith.constant 0 : i32
    %c0_i32_0 = arith.constant 0 : i32
    %c0_i32_1 = arith.constant 0 : i32
    return %arg0, %c0_i32, %c0_i32_0 : i32, i32, i32
  }
  func.func @transform_7(%arg0: i32, %arg1: memref<8xi32, #tpu.memory_space<smem>>) -> (i32, i32) {
    %c0_i32 = arith.constant 0 : i32
    %c0_i32_0 = arith.constant 0 : i32
    %c0_i32_1 = arith.constant 0 : i32
    return %c0_i32, %c0_i32_0 : i32, i32
  }
}

</mosaic_0001>

<llo_original>
// kernel: tpu_custom_call.1
$region0: #{tpu_custom_call.1}
  #allocation0 [shape = 'u32[]', space=smem, size = 0x4, offset = 0x4, fixed_abs, tag = 'smem constant byte address 0x4 - core index']
  #allocation1 [shape = 'u32[144,128]{1,0:T(1,128)}', space=vmem, size = 0x12000, scoped, tag = 'internal scratch']
  #allocation2 [shape = 'f32[1,128]{1,0:T(1,128)}', space=vmem, size = 0x200, scoped, tag = 'scratch operand']
  #allocation3 [shape = 's32[1]{0}', space=sflag, size = 0x4, scoped, tag = 'scoped memory for tpu_custom_call.1']
  #allocation4 [shape = 'u8[512]{0}', space=smem, size = 0x200, scoped, tag = 'prefetched SMEM operand 0']
  %s0 = inlined_call_operand.vmem [shape: s32[8], index: 0, kind: input, shape index: {}]
  %s1 = inlined_call_operand.vmem [shape: bf16[64,1,128], index: 1, kind: input, shape index: {}]
  %s2 = inlined_call_operand.vmem [shape: f32[1,128], index: 2, kind: input, shape index: {}]
  %s3 = inlined_call_operand.hbm [shape: bf16[256,512], index: 3, kind: input, shape index: {}]
  %s4 = inlined_call_operand.vmem [shape: f32[1,512], index: 4, kind: input, shape index: {}]
  %s5 = inlined_call_operand.vmem [shape: bf16[128,128], index: 5, kind: input, shape index: {}]
  %s6 = inlined_call_operand.vmem [shape: f32[1,128], index: 6, kind: input, shape index: {}]
  %s7 = inlined_call_operand.hbm [shape: f32[8,1,128], index: 7, kind: output, shape index: {0}]
  %s8 = inlined_call_operand.hbm [shape: f32[1,128], index: 8, kind: output, shape index: {1}]
  %9 = xla_tuple %s7, %s8
  %s10 = sld [smem:[#allocation0]]
  $region73: #{tpu_custom_call.1} parent=0
    _
  %s12 = ssub.s32 1, %s10
  %s13 = scalar_select 0, %s12, %s10
  %s14 = sshll.u32 %s0, 4
  %s15 = int_to_ptr.vmem [resolvable:$true] %s14
  %17 = dma.vmem_to_smem %s15, 16, [#allocation4], [#allocation3]
  %18 = dma.done [#allocation3], 16
  %19 = sfence
  $region1: #{tpu_custom_call.1} parent=0
    #allocation5 [shape = 'u8[262144]{0}', space=vmem, size = 0x40000, scoped, tag = 'input window, operand 3, single buffered']
    #allocation6 [shape = 's32[2]{0}', space=sflag, size = 0x8, scoped, tag = 'scoped memory for tpu_custom_call.1']
    #allocation7 [shape = 's32[2]{0}', space=sflag, size = 0x8, scoped, tag = 'scoped memory for tpu_custom_call.1']
    #allocation8 [shape = 'u8[1024]{0}', space=vmem, size = 0x400, scoped, tag = 'output window, operand 0']
    #allocation9 [shape = 'u8[512]{0}', space=vmem, size = 0x400, scoped, tag = 'output window, operand 1, single buffered']
    #allocation10 [shape = 's32[1]{0}', space=sflag, size = 0x4, scoped, tag = 'scoped memory for tpu_custom_call.1']
    %20 = vsyncpa [#allocation6], 0
    %21 = vsyncpa [#allocation7], 0
    %s22 = scalar_lea.sflag [#allocation7], 1
    %23 = vsyncpa %s22, 0
    %24 = vsyncpa [#allocation10], 0
    loop: start=0, step=1, limit=10
    $region2: #{tpu_custom_call.1} parent=1 // loop_pre_header
      _
    $region3: #{tpu_custom_call.1} parent=1 // loop_header
      %s26 = sphi 0, %s30
      %p27 = scmp.ge.s32.totalorder %s26, 10
      %s38 = sphi 0, %s40
      %s41 = sphi 0, %s38
      %s42 = sphi 0, %s41
      %s58 = sphi 0, %s42
      %s62 = sphi 0, %s62
      %s64 = sphi 0, %s62
      %s65 = sphi 0, %s64
      %s79 = sphi 0, %s65
      %s83 = sphi 0, %s83
      %s85 = sphi 0, %s83
      %s86 = sphi 0, %s85
      %s100 = sphi 0, %s86
      %s104 = sphi 0, %s104
      %s106 = sphi 0, %s104
      %s107 = sphi 0, %s106
      %s121 = sphi 0, %s107
      %s125 = sphi 0, %s125
      %s127 = sphi 0, %s125
      %s128 = sphi 0, %s127
      %s142 = sphi 0, %s128
      %s146 = sphi 0, %s146
      %s148 = sphi 0, %s146
      %s149 = sphi 0, %s148
      %s163 = sphi 0, %s149
      %s169 = sphi 0, %s171
      %s172 = sphi 0, %s169
      %s173 = sphi 0, %s172
      %s189 = sphi 0, %s173
      %s193 = sphi 0, %s193
      %s195 = sphi 0, %s193
      %s196 = sphi 0, %s195
      %s210 = sphi 0, %s196
    $region4: #{tpu_custom_call.1} parent=1 // loop_header_branch
      %29 = sbr.rel (%p27) target = $region8
    $region5: #{tpu_custom_call.1} parent=1 // loop_body
      %s31 = ssub.s32 %s26, 1
      %s32 = ssub.s32 %s26, 2
      %s33 = sadd.s32 %s26, 1
      %s34 = sld [smem:[#allocation4 + %s26]]
      %s35 = sld [smem:[#allocation4 + %s33]]
      %s36 = ssub.s32 %s34, %s35
      %p37 = scmp.eq.s32.totalorder %s36, 0
      %s39 = sadd.s32 %s38, 1
      %s40 = scalar_select %p37, %s38, %s39
      %p43 = pneg %p37
      %p44 = scmp.eq.s32.totalorder %s26, 7
      %p45 = por %p43, %p44
      %p46 = scmp.ne.s32.totalorder %s38, %s41
      %p47 = scmp.eq.s32.totalorder %s26, 0
      %p48 = por %p46, %p47
      %p49 = scmp.ne.s32.totalorder %s38, %s41
      %p50 = scmp.eq.s32.totalorder %s31, 7
      %p51 = por %p49, %p50
      %p52 = scmp.ne.s32.totalorder %s41, %s42
      %p53 = scmp.eq.s32.totalorder %s31, 0
      %p54 = por %p52, %p53
      %p55 = scmp.ne.s32.totalorder %s41, %s42
      %p56 = scmp.eq.s32.totalorder %s32, 7
      %p57 = por %p55, %p56
      %p59 = scmp.ne.s32.totalorder %s42, %s58
      %p60 = scmp.eq.s32.totalorder %s32, 0
      %p61 = por %p59, %p60
      %s63 = sadd.s32 %s62, 1
      %p66 = scmp.eq.s32.totalorder %s26, 7
      %p67 = scmp.ne.s32.totalorder %s62, %s64
      %p68 = scmp.eq.s32.totalorder %s26, 0
      %p69 = por %p67, %p68
      %p70 = scmp.ne.s32.totalorder %s62, %s64
      %p71 = scmp.eq.s32.totalorder %s31, 7
      %p72 = por %p70, %p71
      %p73 = scmp.ne.s32.totalorder %s64, %s65
      %p74 = scmp.eq.s32.totalorder %s31, 0
      %p75 = por %p73, %p74
      %p76 = scmp.ne.s32.totalorder %s64, %s65
      %p77 = scmp.eq.s32.totalorder %s32, 7
      %p78 = por %p76, %p77
      %p80 = scmp.ne.s32.totalorder %s65, %s79
      %p81 = scmp.eq.s32.totalorder %s32, 0
      %p82 = por %p80, %p81
      %s84 = sadd.s32 %s83, 1
      %p87 = scmp.eq.s32.totalorder %s26, 7
      %p88 = scmp.ne.s32.totalorder %s83, %s85
      %p89 = scmp.eq.s32.totalorder %s26, 0
      %p90 = por %p88, %p89
      %p91 = scmp.ne.s32.totalorder %s83, %s85
      %p92 = scmp.eq.s32.totalorder %s31, 7
      %p93 = por %p91, %p92
      %p94 = scmp.ne.s32.totalorder %s85, %s86
      %p95 = scmp.eq.s32.totalorder %s31, 0
      %p96 = por %p94, %p95
      %p97 = scmp.ne.s32.totalorder %s85, %s86
      %p98 = scmp.eq.s32.totalorder %s32, 7
      %p99 = por %p97, %p98
      %p101 = scmp.ne.s32.totalorder %s86, %s100
      %p102 = scmp.eq.s32.totalorder %s32, 0
      %p103 = por %p101, %p102
      %s105 = sadd.s32 %s104, 1
      %p108 = scmp.eq.s32.totalorder %s26, 7
      %p109 = scmp.ne.s32.totalorder %s104, %s106
      %p110 = scmp.eq.s32.totalorder %s26, 0
      %p111 = por %p109, %p110
      %p112 = scmp.ne.s32.totalorder %s104, %s106
      %p113 = scmp.eq.s32.totalorder %s31, 7
      %p114 = por %p112, %p113
      %p115 = scmp.ne.s32.totalorder %s106, %s107
      %p116 = scmp.eq.s32.totalorder %s31, 0
      %p117 = por %p115, %p116
      %p118 = scmp.ne.s32.totalorder %s106, %s107
      %p119 = scmp.eq.s32.totalorder %s32, 7
      %p120 = por %p118, %p119
      %p122 = scmp.ne.s32.totalorder %s107, %s121
      %p123 = scmp.eq.s32.totalorder %s32, 0
      %p124 = por %p122, %p123
      %s126 = sadd.s32 %s125, 1
      %p129 = scmp.eq.s32.totalorder %s26, 7
      %p130 = scmp.ne.s32.totalorder %s125, %s127
      %p131 = scmp.eq.s32.totalorder %s26, 0
      %p132 = por %p130, %p131
      %p133 = scmp.ne.s32.totalorder %s125, %s127
      %p134 = scmp.eq.s32.totalorder %s31, 7
      %p135 = por %p133, %p134
      %p136 = scmp.ne.s32.totalorder %s127, %s128
      %p137 = scmp.eq.s32.totalorder %s31, 0
      %p138 = por %p136, %p137
      %p139 = scmp.ne.s32.totalorder %s127, %s128
      %p140 = scmp.eq.s32.totalorder %s32, 7
      %p141 = por %p139, %p140
      %p143 = scmp.ne.s32.totalorder %s128, %s142
      %p144 = scmp.eq.s32.totalorder %s32, 0
      %p145 = por %p143, %p144
      %s147 = sadd.s32 %s146, 1
      %p150 = scmp.eq.s32.totalorder %s26, 7
      %p151 = scmp.ne.s32.totalorder %s146, %s148
      %p152 = scmp.eq.s32.totalorder %s26, 0
      %p153 = por %p151, %p152
      %p154 = scmp.ne.s32.totalorder %s146, %s148
      %p155 = scmp.eq.s32.totalorder %s31, 7
      %p156 = por %p154, %p155
      %p157 = scmp.ne.s32.totalorder %s148, %s149
      %p158 = scmp.eq.s32.totalorder %s31, 0
      %p159 = por %p157, %p158
      %p160 = scmp.ne.s32.totalorder %s148, %s149
      %p161 = scmp.eq.s32.totalorder %s32, 7
      %p162 = por %p160, %p161
      %p164 = scmp.ne.s32.totalorder %s149, %s163
      %p165 = scmp.eq.s32.totalorder %s32, 0
      %p166 = por %p164, %p165
      %s167 = ssub.s32 %s26, %s33
      %p168 = scmp.eq.s32.totalorder %s167, 0
      %s170 = sadd.s32 %s169, 1
      %s171 = scalar_select %p168, %s169, %s170
      %p174 = pneg %p168
      %p175 = scmp.eq.s32.totalorder %s26, 7
      %p176 = por %p174, %p175
      %p177 = scmp.ne.s32.totalorder %s169, %s172
      %p178 = scmp.eq.s32.totalorder %s26, 0
      %p179 = por %p177, %p178
      %p180 = scmp.ne.s32.totalorder %s169, %s172
      %p181 = scmp.eq.s32.totalorder %s31, 7
      %p182 = por %p180, %p181
      %p183 = scmp.ne.s32.totalorder %s172, %s173
      %p184 = scmp.eq.s32.totalorder %s31, 0
      %p185 = por %p183, %p184
      %p186 = scmp.ne.s32.totalorder %s172, %s173
      %p187 = scmp.eq.s32.totalorder %s32, 7
      %p188 = por %p186, %p187
      %p190 = scmp.ne.s32.totalorder %s173, %s189
      %p191 = scmp.eq.s32.totalorder %s32, 0
      %p192 = por %p190, %p191
      %s194 = sadd.s32 %s193, 1
      %p197 = scmp.eq.s32.totalorder %s26, 7
      %p198 = scmp.ne.s32.totalorder %s193, %s195
      %p199 = scmp.eq.s32.totalorder %s26, 0
      %p200 = por %p198, %p199
      %p201 = scmp.ne.s32.totalorder %s193, %s195
      %p202 = scmp.eq.s32.totalorder %s31, 7
      %p203 = por %p201, %p202
      %p204 = scmp.ne.s32.totalorder %s195, %s196
      %p205 = scmp.eq.s32.totalorder %s31, 0
      %p206 = por %p204, %p205
      %p207 = scmp.ne.s32.totalorder %s195, %s196
      %p208 = scmp.eq.s32.totalorder %s32, 7
      %p209 = por %p207, %p208
      %p211 = scmp.ne.s32.totalorder %s196, %s210
      %p212 = scmp.eq.s32.totalorder %s32, 0
      %p213 = por %p211, %p212
      %p214 = scmp.le.s32.totalorder 1, %s26
      %p215 = scmp.lt.s32.totalorder %s26, 9
      %p216 = pnand %p214, %p215
      %p217 = pneg %p216
      // Predicated region
      $region9: #{tpu_custom_call.1} parent=5 // pred_check
        _
      $region10: #{tpu_custom_call.1} parent=5 // pred_check_branch
        %219 = sbr.rel (%p216) target = $region12
      $region11: #{tpu_custom_call.1} parent=5 // pred_region
        %s220 = ssub.s32 %s26, 1
        // Predicated region
        $region13: #{tpu_custom_call.1} parent=11 // pred_check
          %p221 = pneg %p75
        $region14: #{tpu_custom_call.1} parent=11 // pred_check_branch
          %223 = sbr.rel (%p221) target = $region16
        $region15: #{tpu_custom_call.1} parent=11 // pred_region
          _
        $region16: #{tpu_custom_call.1} parent=11 // pred_fallthru
          _
        // Predicated region
        $region17: #{tpu_custom_call.1} parent=11 // pred_check
          %p224 = pneg %p96
        $region18: #{tpu_custom_call.1} parent=11 // pred_check_branch
          %226 = sbr.rel (%p224) target = $region20
        $region19: #{tpu_custom_call.1} parent=11 // pred_region
          %s228 = ssub.s32 8192, 8192
          %229 = vsyncadd [#allocation6], %s228
          %s230 = sshll.u32 [#allocation5], 4
          %s231 = int_to_ptr.vmem [resolvable:$true] %s230
          %236 = dma.hbm_to_vmem [thread:$0]  %s3, 8192, %s231, [#allocation6], 256, 256, 16
        $region20: #{tpu_custom_call.1} parent=11 // pred_fallthru
          _
        // Predicated region
        $region21: #{tpu_custom_call.1} parent=11 // pred_check
          %p237 = pneg %p117
        $region22: #{tpu_custom_call.1} parent=11 // pred_check_branch
          %239 = sbr.rel (%p237) target = $region24
        $region23: #{tpu_custom_call.1} parent=11 // pred_region
          _
        $region24: #{tpu_custom_call.1} parent=11 // pred_fallthru
          _
        // Predicated region
        $region25: #{tpu_custom_call.1} parent=11 // pred_check
          %p240 = pneg %p138
        $region26: #{tpu_custom_call.1} parent=11 // pred_check_branch
          %242 = sbr.rel (%p240) target = $region28
        $region27: #{tpu_custom_call.1} parent=11 // pred_region
          _
        $region28: #{tpu_custom_call.1} parent=11 // pred_fallthru
          _
        // Predicated region
        $region29: #{tpu_custom_call.1} parent=11 // pred_check
          %p243 = pneg %p159
        $region30: #{tpu_custom_call.1} parent=11 // pred_check_branch
          %245 = sbr.rel (%p243) target = $region32
        $region31: #{tpu_custom_call.1} parent=11 // pred_region
          _
        $region32: #{tpu_custom_call.1} parent=11 // pred_fallthru
          _
      $region12: #{tpu_custom_call.1} parent=5 // pred_fallthru
        _
      %p246 = scmp.lt.s32.totalorder %s26, 8
      // Predicated region
      $region33: #{tpu_custom_call.1} parent=5 // pred_check
        %p247 = pneg %p246
      $region34: #{tpu_custom_call.1} parent=5 // pred_check_branch
        %249 = sbr.rel (%p247) target = $region36
      $region35: #{tpu_custom_call.1} parent=5 // pred_region
        // Predicated region
        $region37: #{tpu_custom_call.1} parent=35 // pred_check
          %p250 = pneg %p48
        $region38: #{tpu_custom_call.1} parent=35 // pred_check_branch
          %252 = sbr.rel (%p250) target = $region40
        $region39: #{tpu_custom_call.1} parent=35 // pred_region
          %s253 = sld [smem:[#allocation4 + %s26]]
          %p254 = scmp.lt.s32.totalorder %s253, 63
          %s255 = scalar_select %p254, %s253, 63
          %s256 = scalar_lea.vmem %s1, %s255
          %s257 = sld [smem:[#allocation4 + %s26]]
        $region40: #{tpu_custom_call.1} parent=35 // pred_fallthru
          _
      $region36: #{tpu_custom_call.1} parent=5 // pred_fallthru
        _
      %p258 = scmp.le.s32.totalorder 1, %s26
      %p259 = scmp.lt.s32.totalorder %s26, 9
      %p260 = pnand %p258, %p259
      %p261 = pneg %p260
      // Predicated region
      $region41: #{tpu_custom_call.1} parent=5 // pred_check
        _
      $region42: #{tpu_custom_call.1} parent=5 // pred_check_branch
        %263 = sbr.rel (%p260) target = $region44
      $region43: #{tpu_custom_call.1} parent=5 // pred_region
        %s264 = ssub.s32 %s26, 1
        // Predicated region
        $region45: #{tpu_custom_call.1} parent=43 // pred_check
          %p265 = pneg %p96
        $region46: #{tpu_custom_call.1} parent=43 // pred_check_branch
          %267 = sbr.rel (%p265) target = $region48
        $region47: #{tpu_custom_call.1} parent=43 // pred_region
          %268 = dma.done [#allocation6], 8192
        $region48: #{tpu_custom_call.1} parent=43 // pred_fallthru
          _
        %s269 = sld [smem:[#allocation4 + %s31]]
        %p270 = scmp.lt.s32.totalorder %s269, 63
        %s271 = scalar_select %p270, %s269, 63
        %s272 = scalar_lea.vmem %s1, %s271
        %p273 = pneg %p54
        %p274 = pneg %p51
        %p275 = pneg %p75
        %p276 = pneg %p72
        %p277 = pneg %p96
        %p278 = pneg %p93
        %p279 = pneg %p117
        %p280 = pneg %p114
        %p281 = pneg %p138
        %p282 = pneg %p135
        %p283 = pneg %p159
        %p284 = pneg %p156
        %p285 = pneg %p185
        %p286 = pneg %p182
        %s287 = sand.u32 %s172, 1
        %s288 = scalar_lea.sflag [#allocation7], %s287
        %s289 = sand.u32 %s172, 1
        %s290 = scalar_lea.vmem [#allocation8], %s289
        %p291 = pneg %p206
        %p292 = pneg %p203
        %s293 = sld [smem:[#allocation4 + %s31]]
        %p294 = scmp.lt.s32.totalorder %s293, 63
        %s295 = scalar_select %p294, %s293, 63
        %s296 = scalar_lea.vmem %s1, %s295
        %s297 = sld [smem:[#allocation4 + %s31]]
        %p299 = scmp.eq.s32.totalorder %s31, 0
        // Predicated region
        $region49: #{tpu_custom_call.1} parent=43 // pred_check
          %p300 = pneg %p299
        $region50: #{tpu_custom_call.1} parent=43 // pred_check_branch
          %302 = sbr.rel (%p300) target = $region52
        $region51: #{tpu_custom_call.1} parent=43 // pred_region
          %v303 = vld [vmem:[%s2] sm:$0x1]
          %304 = vst [vmem:[#allocation2] sm:$0x1] %v303
        $region52: #{tpu_custom_call.1} parent=43 // pred_fallthru
          _
        %v305 = vld [vmem:[#allocation2] sm:$0x1]
        %v306 = vld [vmem:[%s296] sm:$0x1]
        %v307 = vunpack.c.l.bf16 %v306
        %v308 = vmax.f32 %v307, 0.0
        %v309 = vpack.c.bf16 %v308, %v308
        %v310 = vpack.c.bf16 %v305, %v305
        %v311 = vld [vmem:[#allocation5] sm:$0xff]
        %v312 = vld [vmem:[#allocation5 + $0x8] sm:$0xff]
        %v313 = vld [vmem:[#allocation5 + $0x10] sm:$0xff]
        %v314 = vld [vmem:[#allocation5 + $0x18] sm:$0xff]
        %v315 = vld [vmem:[#allocation5 + $0x20] sm:$0xff]
        %v316 = vld [vmem:[#allocation5 + $0x28] sm:$0xff]
        %v317 = vld [vmem:[#allocation5 + $0x30] sm:$0xff]
        %v318 = vld [vmem:[#allocation5 + $0x38] sm:$0xff]
        %v319 = vld [vmem:[#allocation5 + $0x40] sm:$0xff]
        %v320 = vld [vmem:[#allocation5 + $0x48] sm:$0xff]
        %v321 = vld [vmem:[#allocation5 + $0x50] sm:$0xff]
        %v322 = vld [vmem:[#allocation5 + $0x58] sm:$0xff]
        %v323 = vld [vmem:[#allocation5 + $0x60] sm:$0xff]
        %v324 = vld [vmem:[#allocation5 + $0x68] sm:$0xff]
        %v325 = vld [vmem:[#allocation5 + $0x70] sm:$0xff]
        %v326 = vld [vmem:[#allocation5 + $0x78] sm:$0xff]
        %v327 = vld [vmem:[#allocation5 + $0x80] sm:$0xff]
        %v328 = vld [vmem:[#allocation5 + $0x88] sm:$0xff]
        %v329 = vld [vmem:[#allocation5 + $0x90] sm:$0xff]
        %v330 = vld [vmem:[#allocation5 + $0x98] sm:$0xff]
        %v331 = vld [vmem:[#allocation5 + $0xa0] sm:$0xff]
        %v332 = vld [vmem:[#allocation5 + $0xa8] sm:$0xff]
        %v333 = vld [vmem:[#allocation5 + $0xb0] sm:$0xff]
        %v334 = vld [vmem:[#allocation5 + $0xb8] sm:$0xff]
        %v335 = vld [vmem:[#allocation5 + $0xc0] sm:$0xff]
        %v336 = vld [vmem:[#allocation5 + $0xc8] sm:$0xff]
        %v337 = vld [vmem:[#allocation5 + $0xd0] sm:$0xff]
        %v338 = vld [vmem:[#allocation5 + $0xd8] sm:$0xff]
        %v339 = vld [vmem:[#allocation5 + $0xe0] sm:$0xff]
        %v340 = vld [vmem:[#allocation5 + $0xe8] sm:$0xff]
        %v341 = vld [vmem:[#allocation5 + $0xf0] sm:$0xff]
        %v342 = vld [vmem:[#allocation5 + $0xf8] sm:$0xff]
        %v343 = vld [vmem:[#allocation5 + $0x100] sm:$0xff]
        %v344 = vld [vmem:[#allocation5 + $0x108] sm:$0xff]
        %v345 = vld [vmem:[#allocation5 + $0x110] sm:$0xff]
        %v346 = vld [vmem:[#allocation5 + $0x118] sm:$0xff]
        %v347 = vld [vmem:[#allocation5 + $0x120] sm:$0xff]
        %v348 = vld [vmem:[#allocation5 + $0x128] sm:$0xff]
        %v349 = vld [vmem:[#allocation5 + $0x130] sm:$0xff]
        %v350 = vld [vmem:[#allocation5 + $0x138] sm:$0xff]
        %v351 = vld [vmem:[#allocation5 + $0x140] sm:$0xff]
        %v352 = vld [vmem:[#allocation5 + $0x148] sm:$0xff]
        %v353 = vld [vmem:[#allocation5 + $0x150] sm:$0xff]
        %v354 = vld [vmem:[#allocation5 + $0x158] sm:$0xff]
        %v355 = vld [vmem:[#allocation5 + $0x160] sm:$0xff]
        %v356 = vld [vmem:[#allocation5 + $0x168] sm:$0xff]
        %v357 = vld [vmem:[#allocation5 + $0x170] sm:$0xff]
        %v358 = vld [vmem:[#allocation5 + $0x178] sm:$0xff]
        %v359 = vld [vmem:[#allocation5 + $0x180] sm:$0xff]
        %v360 = vld [vmem:[#allocation5 + $0x188] sm:$0xff]
        %v361 = vld [vmem:[#allocation5 + $0x190] sm:$0xff]
        %v362 = vld [vmem:[#allocation5 + $0x198] sm:$0xff]
        %v363 = vld [vmem:[#allocation5 + $0x1a0] sm:$0xff]
        %v364 = vld [vmem:[#allocation5 + $0x1a8] sm:$0xff]
        %v365 = vld [vmem:[#allocation5 + $0x1b0] sm:$0xff]
        %v366 = vld [vmem:[#allocation5 + $0x1b8] sm:$0xff]
        %v367 = vld [vmem:[#allocation5 + $0x1c0] sm:$0xff]
        %v368 = vld [vmem:[#allocation5 + $0x1c8] sm:$0xff]
        %v369 = vld [vmem:[#allocation5 + $0x1d0] sm:$0xff]
        %v370 = vld [vmem:[#allocation5 + $0x1d8] sm:$0xff]
        %v371 = vld [vmem:[#allocation5 + $0x1e0] sm:$0xff]
        %v372 = vld [vmem:[#allocation5 + $0x1e8] sm:$0xff]
        %v373 = vld [vmem:[#allocation5 + $0x1f0] sm:$0xff]
        %v374 = vld [vmem:[#allocation5 + $0x1f8] sm:$0xff]
        %v375 = vld [vmem:[%s4] sm:$0xf]
        %v440 = vunpack.c.l.b16 %v311
        %v441 = vunpack.c.h.b16 %v311
        %v442 = vunpack.c.l.b16 %v312
        %v443 = vunpack.c.h.b16 %v312
        %v444 = vunpack.c.l.b16 %v313
        %v445 = vunpack.c.h.b16 %v313
        %v446 = vunpack.c.l.b16 %v314
        %v447 = vunpack.c.h.b16 %v314
        %v448 = vunpack.c.l.b16 %v315
        %v449 = vunpack.c.h.b16 %v315
        %v450 = vunpack.c.l.b16 %v316
        %v451 = vunpack.c.h.b16 %v316
        %v452 = vunpack.c.l.b16 %v317
        %v453 = vunpack.c.h.b16 %v317
        %v454 = vunpack.c.l.b16 %v318
        %v455 = vunpack.c.h.b16 %v318
        %v456 = vunpack.c.l.b16 %v319
        %v457 = vunpack.c.h.b16 %v319
        %v458 = vunpack.c.l.b16 %v320
        %v459 = vunpack.c.h.b16 %v320
        %v460 = vunpack.c.l.b16 %v321
        %v461 = vunpack.c.h.b16 %v321
        %v462 = vunpack.c.l.b16 %v322
        %v463 = vunpack.c.h.b16 %v322
        %v464 = vunpack.c.l.b16 %v323
        %v465 = vunpack.c.h.b16 %v323
        %v466 = vunpack.c.l.b16 %v324
        %v467 = vunpack.c.h.b16 %v324
        %v468 = vunpack.c.l.b16 %v325
        %v469 = vunpack.c.h.b16 %v325
        %v470 = vunpack.c.l.b16 %v326
        %v471 = vunpack.c.h.b16 %v326
        %v472 = vunpack.c.l.b16 %v327
        %v473 = vunpack.c.h.b16 %v327
        %v474 = vunpack.c.l.b16 %v328
        %v475 = vunpack.c.h.b16 %v328
        %v476 = vunpack.c.l.b16 %v329
        %v477 = vunpack.c.h.b16 %v329
        %v478 = vunpack.c.l.b16 %v330
        %v479 = vunpack.c.h.b16 %v330
        %v480 = vunpack.c.l.b16 %v331
        %v481 = vunpack.c.h.b16 %v331
        %v482 = vunpack.c.l.b16 %v332
        %v483 = vunpack.c.h.b16 %v332
        %v484 = vunpack.c.l.b16 %v333
        %v485 = vunpack.c.h.b16 %v333
        %v486 = vunpack.c.l.b16 %v334
        %v487 = vunpack.c.h.b16 %v334
        %v488 = vunpack.c.l.b16 %v335
        %v489 = vunpack.c.h.b16 %v335
        %v490 = vunpack.c.l.b16 %v336
        %v491 = vunpack.c.h.b16 %v336
        %v492 = vunpack.c.l.b16 %v337
        %v493 = vunpack.c.h.b16 %v337
        %v494 = vunpack.c.l.b16 %v338
        %v495 = vunpack.c.h.b16 %v338
        %v496 = vunpack.c.l.b16 %v339
        %v497 = vunpack.c.h.b16 %v339
        %v498 = vunpack.c.l.b16 %v340
        %v499 = vunpack.c.h.b16 %v340
        %v500 = vunpack.c.l.b16 %v341
        %v501 = vunpack.c.h.b16 %v341
        %v502 = vunpack.c.l.b16 %v342
        %v503 = vunpack.c.h.b16 %v342
        %v504 = vunpack.c.l.b16 %v343
        %v505 = vunpack.c.h.b16 %v343
        %v506 = vunpack.c.l.b16 %v344
        %v507 = vunpack.c.h.b16 %v344
        %v508 = vunpack.c.l.b16 %v345
        %v509 = vunpack.c.h.b16 %v345
        %v510 = vunpack.c.l.b16 %v346
        %v511 = vunpack.c.h.b16 %v346
        %v512 = vunpack.c.l.b16 %v347
        %v513 = vunpack.c.h.b16 %v347
        %v514 = vunpack.c.l.b16 %v348
        %v515 = vunpack.c.h.b16 %v348
        %v516 = vunpack.c.l.b16 %v349
        %v517 = vunpack.c.h.b16 %v349
        %v518 = vunpack.c.l.b16 %v350
        %v519 = vunpack.c.h.b16 %v350
        %v520 = vunpack.c.l.b16 %v351
        %v521 = vunpack.c.h.b16 %v351
        %v522 = vunpack.c.l.b16 %v352
        %v523 = vunpack.c.h.b16 %v352
        %v524 = vunpack.c.l.b16 %v353
        %v525 = vunpack.c.h.b16 %v353
        %v526 = vunpack.c.l.b16 %v354
        %v527 = vunpack.c.h.b16 %v354
        %v528 = vunpack.c.l.b16 %v355
        %v529 = vunpack.c.h.b16 %v355
        %v530 = vunpack.c.l.b16 %v356
        %v531 = vunpack.c.h.b16 %v356
        %v532 = vunpack.c.l.b16 %v357
        %v533 = vunpack.c.h.b16 %v357
        %v534 = vunpack.c.l.b16 %v358
        %v535 = vunpack.c.h.b16 %v358
        %v536 = vunpack.c.l.b16 %v359
        %v537 = vunpack.c.h.b16 %v359
        %v538 = vunpack.c.l.b16 %v360
        %v539 = vunpack.c.h.b16 %v360
        %v540 = vunpack.c.l.b16 %v361
        %v541 = vunpack.c.h.b16 %v361
        %v542 = vunpack.c.l.b16 %v362
        %v543 = vunpack.c.h.b16 %v362
        %v544 = vunpack.c.l.b16 %v363
        %v545 = vunpack.c.h.b16 %v363
        %v546 = vunpack.c.l.b16 %v364
        %v547 = vunpack.c.h.b16 %v364
        %v548 = vunpack.c.l.b16 %v365
        %v549 = vunpack.c.h.b16 %v365
        %v550 = vunpack.c.l.b16 %v366
        %v551 = vunpack.c.h.b16 %v366
        %v552 = vunpack.c.l.b16 %v367
        %v553 = vunpack.c.h.b16 %v367
        %v554 = vunpack.c.l.b16 %v368
        %v555 = vunpack.c.h.b16 %v368
        %v556 = vunpack.c.l.b16 %v369
        %v557 = vunpack.c.h.b16 %v369
        %v558 = vunpack.c.l.b16 %v370
        %v559 = vunpack.c.h.b16 %v370
        %v560 = vunpack.c.l.b16 %v371
        %v561 = vunpack.c.h.b16 %v371
        %v562 = vunpack.c.l.b16 %v372
        %v563 = vunpack.c.h.b16 %v372
        %v564 = vunpack.c.l.b16 %v373
        %v565 = vunpack.c.h.b16 %v373
        %v566 = vunpack.c.l.b16 %v374
        %v567 = vunpack.c.h.b16 %v374
        %v568 = vpack.c.b16 %v444, %v440
        %v569 = vpack.c.b16 %v445, %v441
        %v570 = vpack.c.b16 %v446, %v442
        %v571 = vpack.c.b16 %v447, %v443
        %v572 = vpack.c.b16 %v452, %v448
        %v573 = vpack.c.b16 %v453, %v449
        %v574 = vpack.c.b16 %v454, %v450
        %v575 = vpack.c.b16 %v455, %v451
        %v576 = vpack.c.b16 %v460, %v456
        %v577 = vpack.c.b16 %v461, %v457
        %v578 = vpack.c.b16 %v462, %v458
        %v579 = vpack.c.b16 %v463, %v459
        %v580 = vpack.c.b16 %v468, %v464
        %v581 = vpack.c.b16 %v469, %v465
        %v582 = vpack.c.b16 %v470, %v466
        %v583 = vpack.c.b16 %v471, %v467
        %v584 = vpack.c.b16 %v476, %v472
        %v585 = vpack.c.b16 %v477, %v473
        %v586 = vpack.c.b16 %v478, %v474
        %v587 = vpack.c.b16 %v479, %v475
        %v588 = vpack.c.b16 %v484, %v480
        %v589 = vpack.c.b16 %v485, %v481
        %v590 = vpack.c.b16 %v486, %v482
        %v591 = vpack.c.b16 %v487, %v483
        %v592 = vpack.c.b16 %v492, %v488
        %v593 = vpack.c.b16 %v493, %v489
        %v594 = vpack.c.b16 %v494, %v490
        %v595 = vpack.c.b16 %v495, %v491
        %v596 = vpack.c.b16 %v500, %v496
        %v597 = vpack.c.b16 %v501, %v497
        %v598 = vpack.c.b16 %v502, %v498
        %v599 = vpack.c.b16 %v503, %v499
        %v600 = vpack.c.b16 %v508, %v504
        %v601 = vpack.c.b16 %v509, %v505
        %v602 = vpack.c.b16 %v510, %v506
        %v603 = vpack.c.b16 %v511, %v507
        %v604 = vpack.c.b16 %v516, %v512
        %v605 = vpack.c.b16 %v517, %v513
        %v606 = vpack.c.b16 %v518, %v514
        %v607 = vpack.c.b16 %v519, %v515
        %v608 = vpack.c.b16 %v524, %v520
        %v609 = vpack.c.b16 %v525, %v521
        %v610 = vpack.c.b16 %v526, %v522
        %v611 = vpack.c.b16 %v527, %v523
        %v612 = vpack.c.b16 %v532, %v528
        %v613 = vpack.c.b16 %v533, %v529
        %v614 = vpack.c.b16 %v534, %v530
        %v615 = vpack.c.b16 %v535, %v531
        %v616 = vpack.c.b16 %v540, %v536
        %v617 = vpack.c.b16 %v541, %v537
        %v618 = vpack.c.b16 %v542, %v538
        %v619 = vpack.c.b16 %v543, %v539
        %v620 = vpack.c.b16 %v548, %v544
        %v621 = vpack.c.b16 %v549, %v545
        %v622 = vpack.c.b16 %v550, %v546
        %v623 = vpack.c.b16 %v551, %v547
        %v624 = vpack.c.b16 %v556, %v552
        %v625 = vpack.c.b16 %v557, %v553
        %v626 = vpack.c.b16 %v558, %v554
        %v627 = vpack.c.b16 %v559, %v555
        %v628 = vpack.c.b16 %v564, %v560
        %v629 = vpack.c.b16 %v565, %v561
        %v630 = vpack.c.b16 %v566, %v562
        %v631 = vpack.c.b16 %v567, %v563
        %v697 = vlaneseq
        %v698 = vshrl.u32 %v697, 7
        %v699 = vsub.s32 0, %v698
        %v700 = vrot.slane %v375, %v699
        %v701 = vlaneseq
        %v702 = vshrl.u32 %v701, 7
        %v703 = vsub.s32 1, %v702
        %v704 = vrot.slane %v375, %v703
        %v705 = vlaneseq
        %v706 = vshrl.u32 %v705, 7
        %v707 = vsub.s32 2, %v706
        %v708 = vrot.slane %v375, %v707
        %v709 = vlaneseq
        %v710 = vshrl.u32 %v709, 7
        %v711 = vsub.s32 3, %v710
        %v712 = vrot.slane %v375, %v711
        %717 = vmatprep.subr.bf16.mxu0 %v569
        %718 = vmatpush1.bf16.msra.mxu0 %v568
        %719 = vmatprep.subr.bf16.mxu0 %v573
        %720 = vmatpush1.bf16.msra.mxu0 %v572
        %721 = vmatprep.subr.bf16.mxu0 %v577
        %722 = vmatpush1.bf16.msra.mxu0 %v576
        %723 = vmatprep.subr.bf16.mxu0 %v581
        %724 = vmatpush1.bf16.msra.mxu0 %v580
        %725 = vmatprep.subr.bf16.mxu0 %v585
        %726 = vmatpush1.bf16.msra.mxu0 %v584
        %727 = vmatprep.subr.bf16.mxu0 %v589
        %728 = vmatpush1.bf16.msra.mxu0 %v588
        %729 = vmatprep.subr.bf16.mxu0 %v593
        %730 = vmatpush1.bf16.msra.mxu0 %v592
        %731 = vmatprep.subr.bf16.mxu0 %v597
        %732 = vmatpush1.bf16.msra.mxu0 %v596
        %733 = vmatprep.subr.bf16.mxu0 %v601
        %734 = vmatpush1.bf16.msra.mxu0 %v600
        %735 = vmatprep.subr.bf16.mxu0 %v605
        %736 = vmatpush1.bf16.msra.mxu0 %v604
        %737 = vmatprep.subr.bf16.mxu0 %v609
        %738 = vmatpush1.bf16.msra.mxu0 %v608
        %739 = vmatprep.subr.bf16.mxu0 %v613
        %740 = vmatpush1.bf16.msra.mxu0 %v612
        %741 = vmatprep.subr.bf16.mxu0 %v617
        %742 = vmatpush1.bf16.msra.mxu0 %v616
        %743 = vmatprep.subr.bf16.mxu0 %v621
        %744 = vmatpush1.bf16.msra.mxu0 %v620
        %745 = vmatprep.subr.bf16.mxu0 %v625
        %746 = vmatpush1.bf16.msra.mxu0 %v624
        %747 = vmatprep.subr.bf16.mxu0 %v629
        %748 = vmatpush1.bf16.msra.mxu0 %v628
        %749 = vmatprep.mubr.bf16.mxu0 %v310
        %750 = vmatmul.mubr.bf16.gmra.mrb[0].mxu0 %v309
        %v751 = vpop.f32.mrb[0].mxu0
        %v752 = vadd.f32 %v700, %v751
        %v753 = vpop.f32.mrb[0].mxu0
        %v754 = vadd.f32 %v704, %v753
        %v755 = vpop.f32.mrb[0].mxu0
        %v756 = vpop.f32.mrb[0].mxu0
        %757 = vdwg.mxu0
        %758 = vmatprep.subr.bf16.mxu0 %v571
        %759 = vmatpush1.bf16.msra.mxu0 %v570
        %760 = vmatprep.subr.bf16.mxu0 %v575
        %761 = vmatpush1.bf16.msra.mxu0 %v574
        %762 = vmatprep.subr.bf16.mxu0 %v579
        %763 = vmatpush1.bf16.msra.mxu0 %v578
        %764 = vmatprep.subr.bf16.mxu0 %v583
        %765 = vmatpush1.bf16.msra.mxu0 %v582
        %766 = vmatprep.subr.bf16.mxu0 %v587
        %767 = vmatpush1.bf16.msra.mxu0 %v586
        %768 = vmatprep.subr.bf16.mxu0 %v591
        %769 = vmatpush1.bf16.msra.mxu0 %v590
        %770 = vmatprep.subr.bf16.mxu0 %v595
        %771 = vmatpush1.bf16.msra.mxu0 %v594
        %772 = vmatprep.subr.bf16.mxu0 %v599
        %773 = vmatpush1.bf16.msra.mxu0 %v598
        %774 = vmatprep.subr.bf16.mxu0 %v603
        %775 = vmatpush1.bf16.msra.mxu0 %v602
        %776 = vmatprep.subr.bf16.mxu0 %v607
        %777 = vmatpush1.bf16.msra.mxu0 %v606
        %778 = vmatprep.subr.bf16.mxu0 %v611
        %779 = vmatpush1.bf16.msra.mxu0 %v610
        %780 = vmatprep.subr.bf16.mxu0 %v615
        %781 = vmatpush1.bf16.msra.mxu0 %v614
        %782 = vmatprep.subr.bf16.mxu0 %v619
        %783 = vmatpush1.bf16.msra.mxu0 %v618
        %784 = vmatprep.subr.bf16.mxu0 %v623
        %785 = vmatpush1.bf16.msra.mxu0 %v622
        %786 = vmatprep.subr.bf16.mxu0 %v627
        %787 = vmatpush1.bf16.msra.mxu0 %v626
        %788 = vmatprep.subr.bf16.mxu0 %v631
        %789 = vmatpush1.bf16.msra.mxu0 %v630
        %790 = vmatprep.mubr.bf16.mxu0 %v310
        %791 = vmatmul.mubr.bf16.gmra.mrb[0].mxu0 %v309
        %v792 = vpop.f32.mrb[0].mxu0
        %v793 = vadd.f32 %v708, %v792
        %v794 = vpop.f32.mrb[0].mxu0
        %v795 = vadd.f32 %v712, %v794
        %v796 = vpop.f32.mrb[0].mxu0
        %v797 = vpop.f32.mrb[0].mxu0
        %798 = vdwg.mxu0
        %v799 = vxor.u32 %v752, 2147483648
        %v800 = vmul.f32 %v799, 1.442695
        %v801 = vpow.pop %v800
        %v802 = vadd.f32 %v801, 1.0
        %v803 = vrcp.pop %v802
        %v804 = vmul.f32 1.0, %v803
        %v805 = vxor.u32 %v754, 2147483648
        %v806 = vmul.f32 %v805, 1.442695
        %v807 = vpow.pop %v806
        %v808 = vadd.f32 %v807, 1.0
        %v809 = vrcp.pop %v808
        %v810 = vmul.f32 1.0, %v809
        %v811 = vmul.f32 %v804, %v795
        %v812 = vadd.f32 %v793, %v811
        %v813 = vtanh.pop %v812
        %v814 = vsub.f32 1.0, %v810
        %v815 = vmul.f32 %v814, %v813
        %v816 = vmul.f32 %v810, %v305
        %v817 = vadd.f32 %v815, %v816
        %818 = vst [vmem:[#allocation2] sm:$0x1] %v817
        %819 = vst [vmem:[#allocation9] sm:$0x1] %v817
        %v820 = vpack.c.bf16 %v817, %v817
        %v821 = vld [vmem:[%s5] sm:$0xf]
        %v822 = vld [vmem:[%s5 + $0x4] sm:$0xf]
        %v823 = vld [vmem:[%s5 + $0x8] sm:$0xf]
        %v824 = vld [vmem:[%s5 + $0xc] sm:$0xf]
        %v825 = vld [vmem:[%s5 + $0x10] sm:$0xf]
        %v826 = vld [vmem:[%s5 + $0x14] sm:$0xf]
        %v827 = vld [vmem:[%s5 + $0x18] sm:$0xf]
        %v828 = vld [vmem:[%s5 + $0x1c] sm:$0xf]
        %v829 = vld [vmem:[%s5 + $0x20] sm:$0xf]
        %v830 = vld [vmem:[%s5 + $0x24] sm:$0xf]
        %v831 = vld [vmem:[%s5 + $0x28] sm:$0xf]
        %v832 = vld [vmem:[%s5 + $0x2c] sm:$0xf]
        %v833 = vld [vmem:[%s5 + $0x30] sm:$0xf]
        %v834 = vld [vmem:[%s5 + $0x34] sm:$0xf]
        %v835 = vld [vmem:[%s5 + $0x38] sm:$0xf]
        %v836 = vld [vmem:[%s5 + $0x3c] sm:$0xf]
        %v837 = vld [vmem:[%s6] sm:$0x1]
        %v854 = vunpack.c.l.b16 %v821
        %v855 = vunpack.c.l.b16 %v822
        %v856 = vunpack.c.l.b16 %v823
        %v857 = vunpack.c.l.b16 %v824
        %v858 = vunpack.c.l.b16 %v825
        %v859 = vunpack.c.l.b16 %v826
        %v860 = vunpack.c.l.b16 %v827
        %v861 = vunpack.c.l.b16 %v828
        %v862 = vunpack.c.l.b16 %v829
        %v863 = vunpack.c.l.b16 %v830
        %v864 = vunpack.c.l.b16 %v831
        %v865 = vunpack.c.l.b16 %v832
        %v866 = vunpack.c.l.b16 %v833
        %v867 = vunpack.c.l.b16 %v834
        %v868 = vunpack.c.l.b16 %v835
        %v869 = vunpack.c.l.b16 %v836
        %v870 = vpack.c.b16 %v855, %v854
        %v871 = vpack.c.b16 %v857, %v856
        %v872 = vpack.c.b16 %v859, %v858
        %v873 = vpack.c.b16 %v861, %v860
        %v874 = vpack.c.b16 %v863, %v862
        %v875 = vpack.c.b16 %v865, %v864
        %v876 = vpack.c.b16 %v867, %v866
        %v877 = vpack.c.b16 %v869, %v868
        %886 = vmatprep.subr.bf16.mxu0 0
        %887 = vmatpush1.bf16.msra.mxu0 %v870
        %888 = vmatprep.subr.bf16.mxu0 0
        %889 = vmatpush1.bf16.msra.mxu0 %v871
        %890 = vmatprep.subr.bf16.mxu0 0
        %891 = vmatpush1.bf16.msra.mxu0 %v872
        %892 = vmatprep.subr.bf16.mxu0 0
        %893 = vmatpush1.bf16.msra.mxu0 %v873
        %894 = vmatprep.subr.bf16.mxu0 0
        %895 = vmatpush1.bf16.msra.mxu0 %v874
        %896 = vmatprep.subr.bf16.mxu0 0
        %897 = vmatpush1.bf16.msra.mxu0 %v875
        %898 = vmatprep.subr.bf16.mxu0 0
        %899 = vmatpush1.bf16.msra.mxu0 %v876
        %900 = vmatprep.subr.bf16.mxu0 0
        %901 = vmatpush1.bf16.msra.mxu0 %v877
        %902 = vmatprep.subr.bf16.mxu0 0
        %903 = vmatpush1.bf16.msra.mxu0 0
        %904 = vmatprep.subr.bf16.mxu0 0
        %905 = vmatpush1.bf16.msra.mxu0 0
        %906 = vmatprep.subr.bf16.mxu0 0
        %907 = vmatpush1.bf16.msra.mxu0 0
        %908 = vmatprep.subr.bf16.mxu0 0
        %909 = vmatpush1.bf16.msra.mxu0 0
        %910 = vmatprep.subr.bf16.mxu0 0
        %911 = vmatpush1.bf16.msra.mxu0 0
        %912 = vmatprep.subr.bf16.mxu0 0
        %913 = vmatpush1.bf16.msra.mxu0 0
        %914 = vmatprep.subr.bf16.mxu0 0
        %915 = vmatpush1.bf16.msra.mxu0 0
        %916 = vmatprep.subr.bf16.mxu0 0
        %917 = vmatpush1.bf16.msra.mxu0 0
        %918 = vmatprep.mubr.bf16.mxu0 0
        %919 = vmatmul.mubr.bf16.gmra.mrb[0].mxu0 %v820
        %v920 = vpop.f32.mrb[0].mxu0
        %v921 = vadd.f32 %v837, %v920
        %v922 = vpop.f32.mrb[0].mxu0
        %v923 = vpop.f32.mrb[0].mxu0
        %v924 = vpop.f32.mrb[0].mxu0
        %925 = vdwg.mxu0
        %vm926 = vcmask 1040384
        %v927 = vsel %vm926, %v921, -inf
        %928 = vmax.xlane.f32.xlu0 %v927
        %v929 = vpop.xlane.xlu0 %928
        %v930 = vsub.f32 %v921, %v929
        %v931 = vmul.f32 %v930, 1.442695
        %v932 = vpow.pop %v931
        %v933 = vsel %vm926, %v932, 0.0
        %934 = vadd.xlane.f32.xlu0 %v933
        %v935 = vpop.xlane.xlu0 %934
        %v936 = vlog2.pop %v935
        %v937 = vmul.f32 %v936, 0.6931472
        %v938 = vsub.f32 %v930, %v937
        %939 = vst [vmem:[%s290] sm:$0x1] %v938
        %s940 = sand.u32 %s172, 1
        %s941 = scalar_lea.sflag [#allocation7], %s940
        %s942 = sand.u32 %s172, 1
        %s943 = scalar_lea.vmem [#allocation8], %s942
        // Predicated region
        $region53: #{tpu_custom_call.1} parent=43 // pred_check
          %p944 = pneg %p182
        $region54: #{tpu_custom_call.1} parent=43 // pred_check_branch
          %946 = sbr.rel (%p944) target = $region56
        $region55: #{tpu_custom_call.1} parent=43 // pred_region
          %s948 = ssub.s32 16, 16
          %949 = vsyncadd %s941, %s948
          %s950 = smul.addr %s31, 16
          %s951 = scalar_lea.hbm %s7, %s950
          %s953 = sshll.u32 %s943, 4
          %s954 = int_to_ptr.vmem [resolvable:$true] %s953
          %956 = dma.vmem_to_hbm [thread:$0]  %s954, 16, %s951, %s941
        $region56: #{tpu_custom_call.1} parent=43 // pred_fallthru
          _
        // Predicated region
        $region57: #{tpu_custom_call.1} parent=43 // pred_check
          %p957 = pneg %p203
        $region58: #{tpu_custom_call.1} parent=43 // pred_check_branch
          %959 = sbr.rel (%p957) target = $region60
        $region59: #{tpu_custom_call.1} parent=43 // pred_region
          %s961 = ssub.s32 16, 16
          %962 = vsyncadd [#allocation10], %s961
          %s964 = sshll.u32 [#allocation9], 4
          %s965 = int_to_ptr.vmem [resolvable:$true] %s964
          %967 = dma.vmem_to_hbm [thread:$0]  %s965, 16, %s8, [#allocation10]
        $region60: #{tpu_custom_call.1} parent=43 // pred_fallthru
          _
        // Predicated region
        $region61: #{tpu_custom_call.1} parent=43 // pred_check
          %p968 = pneg %p203
        $region62: #{tpu_custom_call.1} parent=43 // pred_check_branch
          %970 = sbr.rel (%p968) target = $region64
        $region63: #{tpu_custom_call.1} parent=43 // pred_region
          %971 = dma.done [#allocation10], 16
        $region64: #{tpu_custom_call.1} parent=43 // pred_fallthru
          _
      $region44: #{tpu_custom_call.1} parent=5 // pred_fallthru
        _
      %p972 = scmp.le.s32.totalorder 2, %s26
      // Predicated region
      $region65: #{tpu_custom_call.1} parent=5 // pred_check
        %p973 = pneg %p972
      $region66: #{tpu_custom_call.1} parent=5 // pred_check_branch
        %975 = sbr.rel (%p973) target = $region68
      $region67: #{tpu_custom_call.1} parent=5 // pred_region
        %s976 = ssub.s32 %s26, 2
        // Predicated region
        $region69: #{tpu_custom_call.1} parent=67 // pred_check
          %p977 = pneg %p188
        $region70: #{tpu_custom_call.1} parent=67 // pred_check_branch
          %979 = sbr.rel (%p977) target = $region72
        $region71: #{tpu_custom_call.1} parent=67 // pred_region
          %s980 = sand.u32 %s173, 1
          %s981 = scalar_lea.sflag [#allocation7], %s980
          %s982 = sand.u32 %s173, 1
          %s983 = scalar_lea.vmem [#allocation8], %s982
          %984 = dma.done %s981, 16
        $region72: #{tpu_custom_call.1} parent=67 // pred_fallthru
          _
      $region68: #{tpu_custom_call.1} parent=5 // pred_fallthru
        _
    $region6: #{tpu_custom_call.1} parent=1 // loop_footer
      %s30 = sadd.s32 1, %s26
    $region7: #{tpu_custom_call.1} parent=1 // loop_footer_branch
      %25 = sbr.rel target = $region3
    $region8: #{tpu_custom_call.1} parent=1 // loop_exit
      _
    %985 = vsyncpa [#allocation6], 1
    %s986 = scalar_lea.sflag [#allocation6], 1
    %987 = vsyncpa %s986, 1
    %988 = vsyncpa [#allocation7], 1
    %s989 = scalar_lea.sflag [#allocation7], 1
    %990 = vsyncpa %s989, 1
    %991 = vsyncpa [#allocation10], 1

</llo_original>
